<compile_context>
chip_gen: v7x
topology: tpu7x:2x2x1
jax: 0.10.0
libtpu: 0.0.40
codegen_flags: <defaults>
</compile_context>

<pallas_src>
import functools

import jax
import jax.numpy as jnp
from jax.experimental import pallas as pl
from jax.experimental.pallas import tpu as pltpu


def _bf_layernorm_kernel(x_ref, gamma_ref, o_ref, *, eps, num_features):
    x = x_ref[...].astype(jnp.float32)                 # [TM, C], f32 accumulate
    s1 = jnp.sum(x, axis=-1, keepdims=True)            # [TM, 1]
    s2 = jnp.sum(x * x, axis=-1, keepdims=True)        # [TM, 1]
    inv_c = 1.0 / float(num_features)
    bessel = 1.0 / float(max(num_features - 1, 1))     # torch std: ddof=1
    var = jnp.maximum((s2 - s1 * s1 * inv_c) * bessel, 0.0)  # clamp 1-pass var
    std = jnp.sqrt(var)
    inv = 1.0 / (std + eps)                            # exact: keeps 1e-5 parity
    o_ref[...] = (x * inv * gamma_ref[...]).astype(o_ref.dtype)


def _vmem_capacity_bytes(default=64 * 1024 * 1024):
    try:
        cap = getattr(pltpu.get_tpu_info(), "vmem_capacity_bytes", None)
        if cap:
            return int(cap)
    except Exception:
        pass
    return default  # conservative (v7x per-TC size) if the query is unavailable


def _choose_block_rows(rows, feat, itemsize, vmem_limit_bytes):
    # Target ~2 MiB input blocks; cap so the pipelined footprint
    # (2 buffers x (in + out) in native dtype + f32 temporaries) stays well
    # inside the scoped VMEM limit.
    target_block_bytes = 2 * 1024 * 1024
    tm = target_block_bytes // (feat * itemsize)
    per_row_bytes = feat * (4 * itemsize + 12)
    tm = min(tm, (vmem_limit_bytes * 3 // 5) // per_row_bytes)
    tm = max(8, (tm // 8) * 8)
    if rows <= tm:
        return rows          # single block spanning all rows (always legal)
    return tm                # multiple of 8; ragged final block is masked


def bias_free_layer_norm(x, gamma, eps=1e-7, *, block_rows=None):
    """x: [N, T, C], gamma: [1, 1, C] or [C]. Returns [N, T, C] in x.dtype."""
    N, T, C = x.shape
    R = N * T
    x2 = x.reshape(R, C)                         # contiguous -> view only
    g2 = gamma.reshape(1, C).astype(jnp.float32)

    itemsize = x.dtype.itemsize
    vmem_cap = _vmem_capacity_bytes()
    vmem_limit = int(min(vmem_cap * 3 // 4, 96 * 1024 * 1024))  # 48 MiB v7x, 96 MiB v5e/v6e

    TM = _choose_block_rows(R, C, itemsize, vmem_limit)
    if block_rows is not None and block_rows < R:               # test/override hook
        TM = max(8, (block_rows // 8) * 8)

    grid = (pl.cdiv(R, TM),)

    cost = pl.CostEstimate(
        flops=7 * R * C,                          # x*x, two row sums, scale chain
        transcendentals=R,                        # one sqrt per row
        bytes_accessed=2 * R * C * itemsize + C * 4,
    )

    out = pl.pallas_call(
        functools.partial(_bf_layernorm_kernel, eps=float(eps), num_features=C),
        out_shape=jax.ShapeDtypeStruct((R, C), x.dtype),
        grid=grid,
        in_specs=[
            pl.BlockSpec((TM, C), lambda i: (i, 0)),   # row tile of x
            pl.BlockSpec((1, C), lambda i: (0, 0)),    # gamma resident across steps
        ],
        out_specs=pl.BlockSpec((TM, C), lambda i: (i, 0)),
        compiler_params=pltpu.CompilerParams(
            dimension_semantics=("parallel",),         # v7x: shard tiles over 2 TCs
            vmem_limit_bytes=vmem_limit,
        ),
        cost_estimate=cost,
    )(x2, g2)

    return out.reshape(N, T, C)


def _reference(x, gamma, eps=1e-7):
    # Pure-JAX reference mirroring torch: unbiased std, no mean subtraction.
    xf = x.astype(jnp.float32)
    std = jnp.std(xf, axis=-1, keepdims=True, ddof=1)
    out = xf / (std + eps) * gamma.reshape(1, 1, -1).astype(jnp.float32)
    return out.astype(x.dtype)


if __name__ == "__main__":
    key = jax.random.PRNGKey(0)
    k_x, k_g = jax.random.split(key)

    # LayerNorm over the feature axis of a [N, T, C] activation; C=128 keeps
    # the last dim lane-dense (full 128-lane loads/stores, no masked vst).
    N, T, C = 2, 16, 128
    x = jax.random.normal(k_x, (N, T, C), jnp.float32)
    # Module initializes gamma to ones; perturb so the scale path is exercised.
    gamma = 1.0 + 0.1 * jax.random.normal(k_g, (1, 1, C), jnp.float32)

    out = jax.block_until_ready(bias_free_layer_norm(x, gamma))
    assert out.shape == (N, T, C) and out.dtype == jnp.float32
    ref = _reference(x, gamma)
    assert jnp.allclose(out, ref, atol=1e-5, rtol=1e-5), "f32 mismatch vs reference"

    # Ragged row count + multiple grid steps (partial final block, no pad/slice).
    N2, T2 = 3, 7
    x_r = jax.random.normal(k_x, (N2, T2, C), jnp.float32)
    out_r = jax.block_until_ready(bias_free_layer_norm(x_r, gamma, block_rows=8))
    assert out_r.shape == (N2, T2, C)
    ref_r = _reference(x_r, gamma)
    assert jnp.allclose(out_r, ref_r, atol=1e-5, rtol=1e-5), "ragged mismatch vs reference"

    # Native-dtype I/O: bf16 in -> bf16 out, f32 accumulation inside the kernel.
    x_b = x.astype(jnp.bfloat16)
    out_b = jax.block_until_ready(bias_free_layer_norm(x_b, gamma))
    assert out_b.shape == (N, T, C) and out_b.dtype == jnp.bfloat16
    ref_b = _reference(x_b, gamma).astype(jnp.float32)
    assert jnp.allclose(out_b.astype(jnp.float32), ref_b, atol=5e-2, rtol=5e-2), \
        "bf16 mismatch vs reference"

    print("KERNEL_OK")
</pallas_src>

<mosaic_0001>
module attributes {stable_mosaic.version = 11 : i64} {
  func.func @_bf_layernorm_kernel(%arg0: i32, %arg1: memref<32x128xf32, #tpu.memory_space<vmem>>, %arg2: memref<1x128xf32, #tpu.memory_space<vmem>>, %arg3: memref<32x128xf32, #tpu.memory_space<vmem>>) attributes {dimension_semantics = [#tpu.dimension_semantics<parallel>], iteration_bounds = array<i64: 1>, scalar_prefetch = 0 : i64, scratch_operands = 0 : i64, tpu.core_type = #tpu.core_type<tc>, window_params = [{transform_indices = @transform_0, window_bounds = array<i64: 32, 128>}, {pipeline_mode = #tpu.pipeline_mode<synchronous>, transform_indices = @transform_1, window_bounds = array<i64: 1, 128>}, {transform_indices = @transform_2, window_bounds = array<i64: 32, 128>}]} {
    %c0 = arith.constant 0 : index
    %c0_0 = arith.constant 0 : index
    %0 = vector.load %arg1[%c0, %c0_0] : memref<32x128xf32, #tpu.memory_space<vmem>>, vector<32x128xf32>
    %cst = arith.constant dense<0.000000e+00> : vector<32xf32>
    %1 = vector.multi_reduction <add>, %0, %cst [1] : vector<32x128xf32> to vector<32xf32>
    %2 = vector.shape_cast %1 : vector<32xf32> to vector<32x1xf32>
    %3 = arith.mulf %0, %0 : vector<32x128xf32>
    %cst_1 = arith.constant dense<0.000000e+00> : vector<32xf32>
    %4 = vector.multi_reduction <add>, %3, %cst_1 [1] : vector<32x128xf32> to vector<32xf32>
    %5 = vector.shape_cast %4 : vector<32xf32> to vector<32x1xf32>
    %6 = arith.mulf %2, %2 : vector<32x1xf32>
    %cst_2 = arith.constant 7.812500e-03 : f32
    %7 = vector.broadcast %cst_2 : f32 to vector<32x1xf32>
    %8 = arith.mulf %6, %7 : vector<32x1xf32>
    %9 = arith.subf %5, %8 : vector<32x1xf32>
    %cst_3 = arith.constant 0.00787401571 : f32
    %10 = vector.broadcast %cst_3 : f32 to vector<32x1xf32>
    %11 = arith.mulf %9, %10 : vector<32x1xf32>
    %cst_4 = arith.constant 0.000000e+00 : f32
    %12 = vector.broadcast %cst_4 : f32 to vector<32x1xf32>
    %13 = arith.maximumf %11, %12 : vector<32x1xf32>
    %14 = math.sqrt %13 : vector<32x1xf32>
    %cst_5 = arith.constant 1.000000e-07 : f32
    %15 = vector.broadcast %cst_5 : f32 to vector<32x1xf32>
    %16 = arith.addf %14, %15 : vector<32x1xf32>
    %cst_6 = arith.constant 1.000000e+00 : f32
    %17 = vector.broadcast %cst_6 : f32 to vector<32x1xf32>
    %18 = arith.divf %17, %16 : vector<32x1xf32>
    %19 = vector.broadcast %18 : vector<32x1xf32> to vector<32x128xf32>
    %20 = arith.mulf %0, %19 : vector<32x128xf32>
    %c0_7 = arith.constant 0 : index
    %c0_8 = arith.constant 0 : index
    %21 = vector.load %arg2[%c0_7, %c0_8] : memref<1x128xf32, #tpu.memory_space<vmem>>, vector<1x128xf32>
    %22 = vector.broadcast %21 : vector<1x128xf32> to vector<32x128xf32>
    %23 = arith.mulf %20, %22 : vector<32x128xf32>
    %c0_9 = arith.constant 0 : index
    %c0_10 = arith.constant 0 : index
    %24 = vector.load %arg3[%c0_9, %c0_10] : memref<32x128xf32, #tpu.memory_space<vmem>>, vector<32x128xf32>
    tpu.vector_store %arg3[%c0_9, %c0_10], %23 {strides = array<i32>} : memref<32x128xf32, #tpu.memory_space<vmem>>, vector<32x128xf32>,
    return
  }
  func.func @transform_0(%arg0: i32) -> (i32, i32) {
    %c0_i32 = arith.constant 0 : i32
    %c0_i32_0 = arith.constant 0 : i32
    return %arg0, %c0_i32 : i32, i32
  }
  func.func @transform_1(%arg0: i32) -> (i32, i32) {
    %c0_i32 = arith.constant 0 : i32
    %c0_i32_0 = arith.constant 0 : i32
    %c0_i32_1 = arith.constant 0 : i32
    return %c0_i32, %c0_i32_0 : i32, i32
  }
  func.func @transform_2(%arg0: i32) -> (i32, i32) {
    %c0_i32 = arith.constant 0 : i32
    %c0_i32_0 = arith.constant 0 : i32
    return %arg0, %c0_i32 : i32, i32
  }
}

</mosaic_0001>

<llo_original>
// kernel: tpu_custom_call.1
$region0: #{tpu_custom_call.1}
  #allocation0 [shape = 'u32[]', space=smem, size = 0x4, offset = 0x4, fixed_abs, tag = 'smem constant byte address 0x4 - core index']
  #allocation1 [shape = 'u32[144,128]{1,0:T(1,128)}', space=vmem, size = 0x12000, scoped, tag = 'internal scratch']
  %s0 = inlined_call_operand.hbm [shape: f32[32,128], index: 0, kind: input, shape index: {}]
  %s1 = inlined_call_operand.vmem [shape: f32[1,128], index: 1, kind: input, shape index: {}]
  %s2 = inlined_call_operand.hbm [shape: f32[32,128], index: 2, kind: output, shape index: {}]
  %s3 = sld [smem:[#allocation0]]
  $region22: #{tpu_custom_call.1} parent=0
    _
  %s5 = ssub.s32 1, %s3
  %s6 = scalar_select 0, %s5, %s3
  $region1: #{tpu_custom_call.1} parent=0
    #allocation2 [shape = 'u8[16384]{0}', space=vmem, size = 0x4000, scoped, tag = 'input window, operand 0, single buffered']
    #allocation3 [shape = 's32[1]{0}', space=sflag, size = 0x4, scoped, tag = 'scoped memory for tpu_custom_call.1']
    #allocation4 [shape = 's32[1]{0}', space=sflag, size = 0x4, scoped, tag = 'scoped memory for tpu_custom_call.1']
    #allocation5 [shape = 'u8[16384]{0}', space=vmem, size = 0x4000, scoped, tag = 'output window, operand 0, single buffered']
    %7 = vsyncpa [#allocation3], 0
    %8 = vsyncpa [#allocation4], 0
    // Predicated region
    $region2: #{tpu_custom_call.1} parent=1 // pred_check
      _
    $region3: #{tpu_custom_call.1} parent=1 // pred_check_branch
      %10 = sbr.rel (0) target = $region5
    $region4: #{tpu_custom_call.1} parent=1 // pred_region
      %s12 = ssub.s32 512, 512
      %13 = vsyncadd [#allocation3], %s12
      %s14 = sshll.u32 [#allocation2], 4
      %s15 = int_to_ptr.vmem [resolvable:$true] %s14
      %20 = dma.hbm_to_vmem [thread:$0]  %s0, 512, %s15, [#allocation3], 128, 128, 8
    $region5: #{tpu_custom_call.1} parent=1 // pred_fallthru
      _
    // Predicated region
    $region6: #{tpu_custom_call.1} parent=1 // pred_check
      _
    $region7: #{tpu_custom_call.1} parent=1 // pred_check_branch
      %22 = sbr.rel (0) target = $region9
    $region8: #{tpu_custom_call.1} parent=1 // pred_region
      _
    $region9: #{tpu_custom_call.1} parent=1 // pred_fallthru
      _
    // Predicated region
    $region10: #{tpu_custom_call.1} parent=1 // pred_check
      _
    $region11: #{tpu_custom_call.1} parent=1 // pred_check_branch
      %24 = sbr.rel (0) target = $region13
    $region12: #{tpu_custom_call.1} parent=1 // pred_region
      %25 = dma.done [#allocation3], 512
    $region13: #{tpu_custom_call.1} parent=1 // pred_fallthru
      _
    %v26 = vld [vmem:[#allocation2] sm:$0xff]
    %v27 = vld [vmem:[#allocation2 + $0x8] sm:$0xff]
    %v28 = vld [vmem:[#allocation2 + $0x10] sm:$0xff]
    %v29 = vld [vmem:[#allocation2 + $0x18] sm:$0xff]
    %30 = vadd.xlane.f32.xlu0 %v26
    %v31 = vpop.xlane.xlu0 %30
    %32 = vadd.xlane.f32.xlu0 %v27
    %v33 = vpop.xlane.xlu0 %32
    %34 = vadd.xlane.f32.xlu0 %v28
    %v35 = vpop.xlane.xlu0 %34
    %36 = vadd.xlane.f32.xlu0 %v29
    %v37 = vpop.xlane.xlu0 %36
    %v38 = vmul.f32 %v26, %v26
    %v39 = vmul.f32 %v27, %v27
    %v40 = vmul.f32 %v28, %v28
    %v41 = vmul.f32 %v29, %v29
    %42 = vadd.xlane.f32.xlu0 %v38
    %v43 = vpop.xlane.xlu0 %42
    %44 = vadd.xlane.f32.xlu0 %v39
    %v45 = vpop.xlane.xlu0 %44
    %46 = vadd.xlane.f32.xlu0 %v40
    %v47 = vpop.xlane.xlu0 %46
    %48 = vadd.xlane.f32.xlu0 %v41
    %v49 = vpop.xlane.xlu0 %48
    %v50 = vmul.f32 %v31, %v31
    %v51 = vmul.f32 %v33, %v33
    %v52 = vmul.f32 %v35, %v35
    %v53 = vmul.f32 %v37, %v37
    %v54 = vmul.f32 %v50, 0.0078125
    %v55 = vmul.f32 %v51, 0.0078125
    %v56 = vmul.f32 %v52, 0.0078125
    %v57 = vmul.f32 %v53, 0.0078125
    %v58 = vsub.f32 %v43, %v54
    %v59 = vsub.f32 %v45, %v55
    %v60 = vsub.f32 %v47, %v56
    %v61 = vsub.f32 %v49, %v57
    %v62 = vmul.f32 %v58, 0.007874016
    %v63 = vmul.f32 %v59, 0.007874016
    %v64 = vmul.f32 %v60, 0.007874016
    %v65 = vmul.f32 %v61, 0.007874016
    %v66 = vmax.f32 %v62, 0.0
    %v67 = vmax.f32 %v63, 0.0
    %v68 = vmax.f32 %v64, 0.0
    %v69 = vmax.f32 %v65, 0.0
    %v70 = vrsqrt.pop %v66
    %v71 = vmul.f32 %v66, %v70
    %vm72 = vcmp.eq.f32.partialorder %v66, inf
    %v73 = vsel %vm72, %v66, %v71
    %vm74 = vcmp.eq.f32.partialorder %v66, 0.0
    %v75 = vand.u32 %v66, 2147483648
    %v76 = vsel %vm74, %v75, %v73
    %v77 = vrsqrt.pop %v67
    %v78 = vmul.f32 %v67, %v77
    %vm79 = vcmp.eq.f32.partialorder %v67, inf
    %v80 = vsel %vm79, %v67, %v78
    %vm81 = vcmp.eq.f32.partialorder %v67, 0.0
    %v82 = vand.u32 %v67, 2147483648
    %v83 = vsel %vm81, %v82, %v80
    %v84 = vrsqrt.pop %v68
    %v85 = vmul.f32 %v68, %v84
    %vm86 = vcmp.eq.f32.partialorder %v68, inf
    %v87 = vsel %vm86, %v68, %v85
    %vm88 = vcmp.eq.f32.partialorder %v68, 0.0
    %v89 = vand.u32 %v68, 2147483648
    %v90 = vsel %vm88, %v89, %v87
    %v91 = vrsqrt.pop %v69
    %v92 = vmul.f32 %v69, %v91
    %vm93 = vcmp.eq.f32.partialorder %v69, inf
    %v94 = vsel %vm93, %v69, %v92
    %vm95 = vcmp.eq.f32.partialorder %v69, 0.0
    %v96 = vand.u32 %v69, 2147483648
    %v97 = vsel %vm95, %v96, %v94
    %v98 = vadd.f32 %v76, 1e-07
    %v99 = vadd.f32 %v83, 1e-07
    %v100 = vadd.f32 %v90, 1e-07
    %v101 = vadd.f32 %v97, 1e-07
    %v102 = vrcp.pop %v98
    %v103 = vmul.f32 1.0, %v102
    %v104 = vrcp.pop %v99
    %v105 = vmul.f32 1.0, %v104
    %v106 = vrcp.pop %v100
    %v107 = vmul.f32 1.0, %v106
    %v108 = vrcp.pop %v101
    %v109 = vmul.f32 1.0, %v108
    %v110 = vmul.f32 %v26, %v103
    %v111 = vmul.f32 %v27, %v105
    %v112 = vmul.f32 %v28, %v107
    %v113 = vmul.f32 %v29, %v109
    %v114 = vld [vmem:[%s1] sm:$0x1]
    %v116 = vlaneseq
    %v117 = vshrl.u32 %v116, 7
    %v118 = vsub.s32 0, %v117
    %v119 = vrot.slane %v114, %v118
    %v121 = vmul.f32 %v110, %v119
    %v122 = vmul.f32 %v111, %v119
    %v123 = vmul.f32 %v112, %v119
    %v124 = vmul.f32 %v113, %v119
    %125 = vst [vmem:[#allocation5] sm:$0xff] %v121
    %126 = vst [vmem:[#allocation5 + $0x8] sm:$0xff] %v122
    %127 = vst [vmem:[#allocation5 + $0x10] sm:$0xff] %v123
    %128 = vst [vmem:[#allocation5 + $0x18] sm:$0xff] %v124
    // Predicated region
    $region14: #{tpu_custom_call.1} parent=1 // pred_check
      _
    $region15: #{tpu_custom_call.1} parent=1 // pred_check_branch
      %130 = sbr.rel (0) target = $region17
    $region16: #{tpu_custom_call.1} parent=1 // pred_region
      %s132 = ssub.s32 512, 512
      %133 = vsyncadd [#allocation4], %s132
      %s134 = sshll.u32 [#allocation5], 4
      %s135 = int_to_ptr.vmem [resolvable:$true] %s134
      %140 = dma.vmem_to_hbm [thread:$0]  %s135, 512, %s2, [#allocation4], 128, 128, 8
    $region17: #{tpu_custom_call.1} parent=1 // pred_fallthru
      _
    // Predicated region
    $region18: #{tpu_custom_call.1} parent=1 // pred_check
      _
    $region19: #{tpu_custom_call.1} parent=1 // pred_check_branch
      %142 = sbr.rel (0) target = $region21
    $region20: #{tpu_custom_call.1} parent=1 // pred_region
      %143 = dma.done [#allocation4], 512
    $region21: #{tpu_custom_call.1} parent=1 // pred_fallthru
      _
    %144 = vsyncpa [#allocation3], 1
    %145 = vsyncpa [#allocation4], 1

</llo_original>
